<compile_context>
chip_gen: v5e
topology: v5e:2x2
jax: 0.10.0
libtpu: 0.0.40
codegen_flags: <defaults>
</compile_context>

<pallas_src>
import jax
import jax.numpy as jnp
from jax.experimental import pallas as pl
from jax.experimental.pallas import tpu as pltpu

INPUT_SIZE = 10
HIDDEN_SIZE = 64
OUTPUT_SIZE = 1
TB_CAP = 1024          # batch-tile cap (multiple of 8); per-step VMEM stays small


def mlp_kernel(x_ref, w1_ref, b1_ref, w2_ref, b2_ref, o_ref):
    # x_ref:  [TB, IN]    VMEM (batch tile; tail rows of last block are garbage
    #                     when B % TB != 0 -- masked away on the output store)
    # w1_ref: [IN, HID]   VMEM (resident across grid steps)
    # b1_ref: [1, HID]    VMEM (resident)
    # w2_ref: [1, HID]    VMEM (torch-layout fc2 weight row, resident)
    # b2_ref: [1]         SMEM scalar
    # o_ref:  [TB, 1]     VMEM (true output width -- no lane padding)
    x = x_ref[...]
    h = jnp.dot(x, w1_ref[...], preferred_element_type=jnp.float32) + b1_ref[...]
    h = jnp.maximum(h, 0.0)                                    # ReLU (VPU)
    # fc2 has a single output feature -> weighted reduction over HID.
    # VPU multiply + cross-lane sum (XLU); keeps the MXU out of a [TB,64]@[64,1]
    # pass and avoids its result-FIFO pop latency.
    y = jnp.sum(h * w2_ref[...], axis=-1, keepdims=True) + b2_ref[0]   # [TB, 1]
    o_ref[...] = y.astype(o_ref.dtype)


def prepare_params(w1, b1, w2, b2):
    """One-time layout prep (hoisted out of the per-call forward path).

    Torch layouts in: w1 [HID, IN], b1 [HID], w2 [OUT=1, HID], b2 [OUT=1].
    """
    return (
        jnp.asarray(w1, jnp.float32).T,                        # [IN, HID]
        jnp.asarray(b1, jnp.float32).reshape(1, HIDDEN_SIZE),  # [1, HID]
        jnp.asarray(w2, jnp.float32).reshape(1, HIDDEN_SIZE),  # [1, HID] row
        jnp.asarray(b2, jnp.float32).reshape(1),               # [1] SMEM scalar
    )


def _round_up(n, m):
    return ((n + m - 1) // m) * m


def _pick_tb(batch):
    """Batch tile: multiple of 8 (f32 sublane).

    For B > 8 the tile is sized so the grid has at least 2 steps (lets v7x's
    two TensorCores split the 'parallel' batch axis), capped at TB_CAP so big
    batches pipeline across the grid with large, near-roofline tiles.
    """
    if batch <= 8:
        return 8
    return min(TB_CAP, _round_up(pl.cdiv(batch, 2), 8))


def simple_net_forward(x, w1_t, b1_r, w2_row, b2_s, *, tb=None):
    """x: [B, INPUT_SIZE] f32 -> [B, OUTPUT_SIZE] f32."""
    B = x.shape[0]
    TB = _pick_tb(B) if tb is None else tb
    grid = (pl.cdiv(B, TB),)   # partial trailing block handled by Pallas (no jnp.pad)

    return pl.pallas_call(
        mlp_kernel,
        out_shape=jax.ShapeDtypeStruct((B, OUTPUT_SIZE), jnp.float32),
        grid=grid,
        in_specs=[
            pl.BlockSpec((TB, INPUT_SIZE), lambda i: (i, 0)),           # batch tile
            pl.BlockSpec((INPUT_SIZE, HIDDEN_SIZE), lambda i: (0, 0)),  # resident
            pl.BlockSpec((1, HIDDEN_SIZE), lambda i: (0, 0)),           # resident
            pl.BlockSpec((1, HIDDEN_SIZE), lambda i: (0, 0)),           # resident
            pl.BlockSpec(memory_space=pltpu.MemorySpace.SMEM),          # b2 scalar
        ],
        out_specs=pl.BlockSpec((TB, OUTPUT_SIZE), lambda i: (i, 0)),
        compiler_params=pltpu.CompilerParams(
            # Batch tiles are independent -> lets v7x's two TensorCores split them.
            dimension_semantics=("parallel",)
        ),
    )(x, w1_t, b1_r, w2_row, b2_s)


def _reference(x, w1, b1, w2, b2):
    return jnp.maximum(x @ w1.T + b1, 0.0) @ w2.T + b2


if __name__ == "__main__":
    key = jax.random.PRNGKey(0)
    k_x, k_w1, k_b1, k_w2, k_b2, k_x2 = jax.random.split(key, 6)

    # Deterministic synthetic parameters (torch-like uniform init bounds).
    bound1 = 1.0 / (INPUT_SIZE ** 0.5)
    bound2 = 1.0 / (HIDDEN_SIZE ** 0.5)
    w1 = jax.random.uniform(k_w1, (HIDDEN_SIZE, INPUT_SIZE), jnp.float32, -bound1, bound1)
    b1 = jax.random.uniform(k_b1, (HIDDEN_SIZE,), jnp.float32, -bound1, bound1)
    w2 = jax.random.uniform(k_w2, (OUTPUT_SIZE, HIDDEN_SIZE), jnp.float32, -bound2, bound2)
    b2 = jax.random.uniform(k_b2, (OUTPUT_SIZE,), jnp.float32, -bound2, bound2)

    params = prepare_params(w1, b1, w2, b2)   # one-time layout prep (not per-call)
    forward = jax.jit(simple_net_forward)

    # Small batch (single grid step).
    batch = 8
    x = jax.random.normal(k_x, (batch, INPUT_SIZE), dtype=jnp.float32)
    out = jax.block_until_ready(forward(x, *params))
    ref = _reference(x, w1, b1, w2, b2)
    assert out.shape == (batch, OUTPUT_SIZE)
    assert jnp.allclose(out, ref, atol=1e-5, rtol=1e-5), (
        f"max err {jnp.max(jnp.abs(out - ref))}")

    # Non-multiple batch: exercises the 2-step grid + masked partial tail block.
    batch2 = 200
    x2 = jax.random.normal(k_x2, (batch2, INPUT_SIZE), dtype=jnp.float32)
    out2 = jax.block_until_ready(forward(x2, *params))
    ref2 = _reference(x2, w1, b1, w2, b2)
    assert out2.shape == (batch2, OUTPUT_SIZE)
    assert jnp.allclose(out2, ref2, atol=1e-5, rtol=1e-5), (
        f"max err {jnp.max(jnp.abs(out2 - ref2))}")

    print("KERNEL_OK")
</pallas_src>

<mosaic_0001>
module attributes {stable_mosaic.version = 11 : i64} {
  func.func @mlp_kernel(%arg0: i32, %arg1: memref<8x10xf32, #tpu.memory_space<vmem>>, %arg2: memref<10x64xf32, #tpu.memory_space<vmem>>, %arg3: memref<1x64xf32, #tpu.memory_space<vmem>>, %arg4: memref<1x64xf32, #tpu.memory_space<vmem>>, %arg5: memref<1xf32, #tpu.memory_space<smem>>, %arg6: memref<8x1xf32, #tpu.memory_space<vmem>>) attributes {dimension_semantics = [#tpu.dimension_semantics<parallel>], iteration_bounds = array<i64: 1>, scalar_prefetch = 0 : i64, scratch_operands = 0 : i64, tpu.core_type = #tpu.core_type<tc>, window_params = [{transform_indices = @transform_0, window_bounds = array<i64: 8, 10>}, {pipeline_mode = #tpu.pipeline_mode<synchronous>, transform_indices = @transform_1, window_bounds = array<i64: 10, 64>}, {pipeline_mode = #tpu.pipeline_mode<synchronous>, transform_indices = @transform_2, window_bounds = array<i64: 1, 64>}, {pipeline_mode = #tpu.pipeline_mode<synchronous>, transform_indices = @transform_3, window_bounds = array<i64: 1, 64>}, {transform_indices = @transform_4, window_bounds = array<i64: 1>}, {transform_indices = @transform_5, window_bounds = array<i64: 8, 1>}]} {
    %c0 = arith.constant 0 : index
    %c0_0 = arith.constant 0 : index
    %0 = vector.load %arg1[%c0, %c0_0] : memref<8x10xf32, #tpu.memory_space<vmem>>, vector<8x10xf32>
    %c0_1 = arith.constant 0 : index
    %c0_2 = arith.constant 0 : index
    %1 = vector.load %arg2[%c0_1, %c0_2] : memref<10x64xf32, #tpu.memory_space<vmem>>, vector<10x64xf32>
    %cst = arith.constant dense<0.000000e+00> : vector<8x64xf32>
    %2 = tpu.matmul %0, %1, %cst {dimension_numbers = #tpu.dot_dimension_numbers<[1], [0], [0], [1], [0, 0, 1, 1], [], []>} : vector<8x10xf32>, vector<10x64xf32>, vector<8x64xf32> -> vector<8x64xf32>
    %c0_3 = arith.constant 0 : index
    %c0_4 = arith.constant 0 : index
    %3 = vector.load %arg3[%c0_3, %c0_4] : memref<1x64xf32, #tpu.memory_space<vmem>>, vector<1x64xf32>
    %4 = vector.broadcast %3 : vector<1x64xf32> to vector<8x64xf32>
    %5 = arith.addf %2, %4 : vector<8x64xf32>
    %cst_5 = arith.constant 0.000000e+00 : f32
    %6 = vector.broadcast %cst_5 : f32 to vector<8x64xf32>
    %7 = arith.maximumf %5, %6 : vector<8x64xf32>
    %c0_6 = arith.constant 0 : index
    %c0_7 = arith.constant 0 : index
    %8 = vector.load %arg4[%c0_6, %c0_7] : memref<1x64xf32, #tpu.memory_space<vmem>>, vector<1x64xf32>
    %9 = vector.broadcast %8 : vector<1x64xf32> to vector<8x64xf32>
    %10 = arith.mulf %7, %9 : vector<8x64xf32>
    %cst_8 = arith.constant dense<0.000000e+00> : vector<8xf32>
    %11 = vector.multi_reduction <add>, %10, %cst_8 [1] : vector<8x64xf32> to vector<8xf32>
    %12 = vector.shape_cast %11 : vector<8xf32> to vector<8x1xf32>
    %c0_9 = arith.constant 0 : index
    %13 = memref.load %arg5[%c0_9] : memref<1xf32, #tpu.memory_space<smem>>
    %14 = vector.broadcast %13 : f32 to vector<8x1xf32>
    %15 = arith.addf %12, %14 : vector<8x1xf32>
    %c0_10 = arith.constant 0 : index
    %c0_11 = arith.constant 0 : index
    %16 = vector.load %arg6[%c0_10, %c0_11] : memref<8x1xf32, #tpu.memory_space<vmem>>, vector<8x1xf32>
    tpu.vector_store %arg6[%c0_10, %c0_11], %15 {strides = array<i32>} : memref<8x1xf32, #tpu.memory_space<vmem>>, vector<8x1xf32>,
    return
  }
  func.func @transform_0(%arg0: i32) -> (i32, i32) {
    %c0_i32 = arith.constant 0 : i32
    %c0_i32_0 = arith.constant 0 : i32
    return %arg0, %c0_i32 : i32, i32
  }
  func.func @transform_1(%arg0: i32) -> (i32, i32) {
    %c0_i32 = arith.constant 0 : i32
    %c0_i32_0 = arith.constant 0 : i32
    %c0_i32_1 = arith.constant 0 : i32
    return %c0_i32, %c0_i32_0 : i32, i32
  }
  func.func @transform_2(%arg0: i32) -> (i32, i32) {
    %c0_i32 = arith.constant 0 : i32
    %c0_i32_0 = arith.constant 0 : i32
    %c0_i32_1 = arith.constant 0 : i32
    return %c0_i32, %c0_i32_0 : i32, i32
  }
  func.func @transform_3(%arg0: i32) -> (i32, i32) {
    %c0_i32 = arith.constant 0 : i32
    %c0_i32_0 = arith.constant 0 : i32
    %c0_i32_1 = arith.constant 0 : i32
    return %c0_i32, %c0_i32_0 : i32, i32
  }
  func.func @transform_4(%arg0: i32) -> i32 {
    %c0_i32 = arith.constant 0 : i32
    %c0_i32_0 = arith.constant 0 : i32
    return %c0_i32 : i32
  }
  func.func @transform_5(%arg0: i32) -> (i32, i32) {
    %c0_i32 = arith.constant 0 : i32
    %c0_i32_0 = arith.constant 0 : i32
    return %arg0, %c0_i32 : i32, i32
  }
}

</mosaic_0001>

<llo_original>
// kernel: simple_net_forward.1
$region0: #{simple_net_forward.1}
  #allocation0 [shape = 'u32[]', space=smem, size = 0x4, offset = 0x4, fixed_abs, tag = 'smem constant byte address 0x4 - core index']
  #allocation1 [shape = 'u32[72,128]{1,0:T(1,128)}', space=vmem, size = 0x9000, scoped, tag = 'internal scratch']
  #allocation2 [shape = 'f32[1]{0:T(128)S(6)}', space=smem, size = 0x200, scoped, tag = 'scoped memory for simple_net_forward.1']
  %s0 = inlined_call_operand.hbm [shape: f32[8,10], index: 0, kind: input, shape index: {}]
  %s1 = inlined_call_operand.hbm [shape: f32[10,64], index: 1, kind: input, shape index: {}]
  %s2 = inlined_call_operand.vmem [shape: f32[1,64], index: 2, kind: input, shape index: {}]
  %s3 = inlined_call_operand.vmem [shape: f32[1,64], index: 3, kind: input, shape index: {}]
  %s4 = inlined_call_operand.<no memory space> [shape: f32[1], index: 4, kind: input, shape index: {}]
  %s5 = inlined_call_operand.vmem [shape: f32[8,1], index: 5, kind: output, shape index: {}]
  %s6 = sld [smem:[#allocation0]]
  $region38: #{simple_net_forward.1} parent=0
    _
  %s8 = ssub.s32 1, %s6
  %s9 = scalar_select 0, %s8, %s6
  %10 = sst [smem:[#allocation2]] %s4
  $region1: #{simple_net_forward.1} parent=0
    #allocation3 [shape = 'u8[4096]{0}', space=vmem, size = 0x1000, scoped, tag = 'input window, operand 0, single buffered']
    #allocation4 [shape = 's32[1]{0}', space=sflag, size = 0x4, scoped, tag = 'scoped memory for simple_net_forward.1']
    #allocation5 [shape = 'u8[8192]{0}', space=vmem, size = 0x2000, scoped, tag = 'input window, operand 1, single buffered']
    #allocation6 [shape = 's32[1]{0}', space=sflag, size = 0x4, scoped, tag = 'scoped memory for simple_net_forward.1']
    %11 = vsyncpa [#allocation4], 0
    %12 = vsyncpa [#allocation6], 0
    // Predicated region
    $region2: #{simple_net_forward.1} parent=1 // pred_check
      _
    $region3: #{simple_net_forward.1} parent=1 // pred_check_branch
      %14 = sbr.rel (0) target = $region5
    $region4: #{simple_net_forward.1} parent=1 // pred_region
      %16 = vsyncadd [#allocation4], 0
      %s18 = sshll.u32 %s0, 4
      %s19 = int_to_ptr.hbm [resolvable:$true] %s18
      %s20 = sshll.u32 [#allocation3], 4
      %s21 = int_to_ptr.vmem [resolvable:$true] %s20
      %23 = dma.hbm_to_vmem [thread:$0]  %s19, 128, %s21, [#allocation4]
    $region5: #{simple_net_forward.1} parent=1 // pred_fallthru
      _
    // Predicated region
    $region6: #{simple_net_forward.1} parent=1 // pred_check
      _
    $region7: #{simple_net_forward.1} parent=1 // pred_check_branch
      %25 = sbr.rel (0) target = $region9
    $region8: #{simple_net_forward.1} parent=1 // pred_region
      %27 = vsyncadd [#allocation6], 0
      %s28 = sshll.u32 %s1, 4
      %s29 = int_to_ptr.hbm [resolvable:$true] %s28
      %s30 = sshll.u32 [#allocation5], 4
      %s31 = int_to_ptr.vmem [resolvable:$true] %s30
      %36 = dma.hbm_to_vmem [thread:$0]  %s29, 256, %s31, [#allocation6], 128, 128, 8
    $region9: #{simple_net_forward.1} parent=1 // pred_fallthru
      _
    // Predicated region
    $region10: #{simple_net_forward.1} parent=1 // pred_check
      _
    $region11: #{simple_net_forward.1} parent=1 // pred_check_branch
      %38 = sbr.rel (0) target = $region13
    $region12: #{simple_net_forward.1} parent=1 // pred_region
      _
    $region13: #{simple_net_forward.1} parent=1 // pred_fallthru
      _
    // Predicated region
    $region14: #{simple_net_forward.1} parent=1 // pred_check
      _
    $region15: #{simple_net_forward.1} parent=1 // pred_check_branch
      %40 = sbr.rel (0) target = $region17
    $region16: #{simple_net_forward.1} parent=1 // pred_region
      _
    $region17: #{simple_net_forward.1} parent=1 // pred_fallthru
      _
    // Predicated region
    $region18: #{simple_net_forward.1} parent=1 // pred_check
      _
    $region19: #{simple_net_forward.1} parent=1 // pred_check_branch
      %42 = sbr.rel (0) target = $region21
    $region20: #{simple_net_forward.1} parent=1 // pred_region
      _
    $region21: #{simple_net_forward.1} parent=1 // pred_fallthru
      _
    // Predicated region
    $region22: #{simple_net_forward.1} parent=1 // pred_check
      _
    $region23: #{simple_net_forward.1} parent=1 // pred_check_branch
      %44 = sbr.rel (0) target = $region25
    $region24: #{simple_net_forward.1} parent=1 // pred_region
      %46 = dma.done [#allocation4], 128
    $region25: #{simple_net_forward.1} parent=1 // pred_fallthru
      _
    // Predicated region
    $region26: #{simple_net_forward.1} parent=1 // pred_check
      _
    $region27: #{simple_net_forward.1} parent=1 // pred_check_branch
      %48 = sbr.rel (0) target = $region29
    $region28: #{simple_net_forward.1} parent=1 // pred_region
      %50 = dma.done [#allocation6], 256
    $region29: #{simple_net_forward.1} parent=1 // pred_fallthru
      _
    %v51 = vld [vmem:[#allocation3] sm:$0xff]
    %v52 = vld [vmem:[#allocation5] sm:$0xff]
    %v53 = vld [vmem:[#allocation5 + $0x8] sm:$0x3]
    %v54 = vld [vmem:[%s2] sm:$0x1]
    %v56 = vperm.slane %v54, 0
    %vm58 = vcmask 80896
    %v60 = vsel %vm58, %v51, 0
    %vm62 = vcmask 1041408
    %v64 = vsel %vm62, %v53, 0
    %66 = vmatpush.msra.mxu0 0.0
    %67 = vmatpush.msra.mxu0 0.0
    %68 = vmatpush.msra.mxu0 0.0
    %69 = vmatpush.msra.mxu0 0.0
    %70 = vmatpush.msra.mxu0 0.0
    %71 = vmatpush.msra.mxu0 0.0
    %72 = vmatpush.msra.mxu0 0.0
    %73 = vmatpush.msra.mxu0 0.0
    %74 = vmatpush.msra.mxu0 0.0
    %75 = vmatpush.msra.mxu0 0.0
    %76 = vmatpush.msra.mxu0 0.0
    %77 = vmatpush.msra.mxu0 0.0
    %78 = vmatpush.msra.mxu0 0.0
    %79 = vmatpush.msra.mxu0 0.0
    %80 = vmatpush.msra.mxu0 %v64
    %81 = vmatpush.msra.mxu0 %v52
    %82 = vmatmul.f32.gmra.mxu0 %v60
    %v83 = vpop.f32.mrf.mxu0
    %v84 = vadd.f32 %v56, %v83
    %85 = vdwg.mxu0
    %v86 = vmax.f32 %v84, 0.0
    %v87 = vld [vmem:[%s3] sm:$0x1]
    %v89 = vperm.slane %v87, 0
    %v91 = vmul.f32 %v86, %v89
    %vm92 = vcmask 523264
    %v93 = vsel %vm92, %v91, 0.0
    %94 = vadd.xlane.f32.xlu0 %v93
    %v95 = vpop.xlane.xlu0 %94
    %s96 = sld [smem:[#allocation2]]
    %v97 = vstv %s96
    %v98 = vadd.f32 %v95, %v97
    %vm99 = vcmask 7168
    %100 = vst.msk [vmem:[%s5] sm:$0xff] %vm99, %v98
    // Predicated region
    $region30: #{simple_net_forward.1} parent=1 // pred_check
      _
    $region31: #{simple_net_forward.1} parent=1 // pred_check_branch
      %102 = sbr.rel (0) target = $region33
    $region32: #{simple_net_forward.1} parent=1 // pred_region
      _
    $region33: #{simple_net_forward.1} parent=1 // pred_fallthru
      _
    // Predicated region
    $region34: #{simple_net_forward.1} parent=1 // pred_check
      _
    $region35: #{simple_net_forward.1} parent=1 // pred_check_branch
      %104 = sbr.rel (0) target = $region37
    $region36: #{simple_net_forward.1} parent=1 // pred_region
      _
    $region37: #{simple_net_forward.1} parent=1 // pred_fallthru
      _
    %105 = vsyncpa [#allocation4], 1
    %106 = vsyncpa [#allocation6], 1

</llo_original>
